<compile_context>
chip_gen: v5e
topology: v5e:2x2
jax: 0.10.0
libtpu: 0.0.40
codegen_flags: <defaults>
</compile_context>

<pallas_src>
import jax
import jax.numpy as jnp
from jax.experimental import pallas as pl
from jax.experimental.pallas import tpu as pltpu

HIDDEN = 64          # logical hidden width (matches the PyTorch module)
HP = 128             # padded hidden width (lane-dense for the two 128x128 layers)


def _round_up(x, m):
    return ((x + m - 1) // m) * m


# ----------------------------------------------------------------------------
# Kernel: one batch tile of the whole 3-layer MLP.
# bf16 operands into the MXU, f32 accumulation, f32 bias add + ReLU on the VPU.
# ----------------------------------------------------------------------------
def qnetwork_kernel(x_ref, w1_ref, w2_ref, w3_ref, b1_ref, b2_ref, b3_ref, out_ref):
    x = x_ref[...].astype(jnp.bfloat16)
    h1 = jnp.dot(x, w1_ref[...], preferred_element_type=jnp.float32) + b1_ref[...]
    h1 = jnp.maximum(h1, 0.0).astype(jnp.bfloat16)
    h2 = jnp.dot(h1, w2_ref[...], preferred_element_type=jnp.float32) + b2_ref[...]
    h2 = jnp.maximum(h2, 0.0).astype(jnp.bfloat16)
    q = jnp.dot(h2, w3_ref[...], preferred_element_type=jnp.float32) + b3_ref[...]
    out_ref[...] = q.astype(out_ref.dtype)


# ----------------------------------------------------------------------------
# Parameter packing: pad hidden dim 64 -> 128 (padded channels are exactly 0
# pre-ReLU, so the padded network equals the original on the first A output
# columns), pad the output dim to a multiple of 8, cast weights to bf16,
# keep biases f32 (added after f32 accumulation).
# ----------------------------------------------------------------------------
def prepare_params(params):
    w1, b1 = params["w1"], params["b1"]          # (S, 64), (64,)
    w2, b2 = params["w2"], params["b2"]          # (64, 64), (64,)
    w3, b3 = params["w3"], params["b3"]          # (64, A), (A,)
    S = w1.shape[0]
    A = w3.shape[1]
    OP = _round_up(A, 8)                         # padded output width (small writeback)

    w1p = jnp.zeros((S, HP), jnp.float32).at[:, :HIDDEN].set(w1).astype(jnp.bfloat16)
    w2p = (jnp.zeros((HP, HP), jnp.float32)
               .at[:HIDDEN, :HIDDEN].set(w2).astype(jnp.bfloat16))
    w3p = (jnp.zeros((HP, OP), jnp.float32)
               .at[:HIDDEN, :A].set(w3).astype(jnp.bfloat16))

    b1p = jnp.zeros((1, HP), jnp.float32).at[0, :HIDDEN].set(b1)
    b2p = jnp.zeros((1, HP), jnp.float32).at[0, :HIDDEN].set(b2)
    b3p = jnp.zeros((1, OP), jnp.float32).at[0, :A].set(b3)

    return {"w1": w1p, "w2": w2p, "w3": w3p,
            "b1": b1p, "b2": b2p, "b3": b3p,
            "state_size": S, "action_size": A, "out_pad": OP}


# ----------------------------------------------------------------------------
# Wrapper: batch-tiled pallas_call.  Weights/biases stay VMEM-resident
# (constant index_maps); activations stream over a "parallel" batch grid.
# No wrapper-side copies of the state; ragged last block handled by Pallas.
# ----------------------------------------------------------------------------
def qnetwork_forward(state, packed, *, tile_b=2048):
    S = packed["state_size"]
    A = packed["action_size"]
    OP = packed["out_pad"]
    B = state.shape[0]
    assert state.shape[1] == S, "packed params do not match state_size"

    # Batch tile: multiple of 8 (f32 sublane), capped for small batches, and
    # capped at ~B/2 when possible so the grid has >=2 steps (v7x: 2 TCs).
    tb = min(_round_up(tile_b, 8), _round_up(B, 8))
    if B > 8:
        tb = min(tb, _round_up(-(-B // 2), 8))
    grid = pl.cdiv(B, tb)

    q_pad = pl.pallas_call(
        qnetwork_kernel,
        out_shape=jax.ShapeDtypeStruct((B, OP), jnp.float32),
        grid_spec=pltpu.PrefetchScalarGridSpec(
            num_scalar_prefetch=0,
            grid=(grid,),
            in_specs=[
                pl.BlockSpec((tb, S), lambda i: (i, 0)),    # state: streamed
                pl.BlockSpec((S, HP), lambda i: (0, 0)),    # w1: VMEM-resident
                pl.BlockSpec((HP, HP), lambda i: (0, 0)),   # w2: VMEM-resident
                pl.BlockSpec((HP, OP), lambda i: (0, 0)),   # w3: VMEM-resident
                pl.BlockSpec((1, HP), lambda i: (0, 0)),    # b1
                pl.BlockSpec((1, HP), lambda i: (0, 0)),    # b2
                pl.BlockSpec((1, OP), lambda i: (0, 0)),    # b3
            ],
            out_specs=pl.BlockSpec((tb, OP), lambda i: (i, 0)),  # narrow writeback
        ),
        compiler_params=pltpu.CompilerParams(
            dimension_semantics=("parallel",)),
    )(state.astype(jnp.float32), packed["w1"], packed["w2"], packed["w3"],
      packed["b1"], packed["b2"], packed["b3"])

    return q_pad[:, :A]


# ----------------------------------------------------------------------------
# Init mirroring the PyTorch module: weights ~ N(0, std=0.1); biases use the
# default nn.Linear init U(-1/sqrt(fan_in), +1/sqrt(fan_in)).
# Weights stored transposed as (in_features, out_features).
# ----------------------------------------------------------------------------
def init_qnetwork_params(key, state_size, action_size, hidden=(HIDDEN, HIDDEN)):
    k1, k2, k3, kb1, kb2, kb3 = jax.random.split(key, 6)
    h1, h2 = hidden

    def bias(k, fan_in, n):
        bound = 1.0 / jnp.sqrt(jnp.float32(fan_in))
        return jax.random.uniform(k, (n,), jnp.float32, -bound, bound)

    return {
        "w1": 0.1 * jax.random.normal(k1, (state_size, h1), jnp.float32),
        "b1": bias(kb1, state_size, h1),
        "w2": 0.1 * jax.random.normal(k2, (h1, h2), jnp.float32),
        "b2": bias(kb2, h1, h2),
        "w3": 0.1 * jax.random.normal(k3, (h2, action_size), jnp.float32),
        "b3": bias(kb3, h2, action_size),
    }


def qnetwork_reference(state, params):
    h1 = jnp.maximum(state @ params["w1"] + params["b1"], 0.0)
    h2 = jnp.maximum(h1 @ params["w2"] + params["b2"], 0.0)
    return h2 @ params["w3"] + params["b3"]


if __name__ == "__main__":
    key = jax.random.PRNGKey(0)
    k_params, k_state, k_state2 = jax.random.split(key, 3)

    state_size = 8      # LunarLander-like small state dim
    action_size = 4

    params = init_qnetwork_params(k_params, state_size, action_size)
    packed = prepare_params(params)

    # Small inference-style batch (single tile).
    batch = 8
    state = jax.random.normal(k_state, (batch, state_size), jnp.float32)
    q_pallas = jax.block_until_ready(qnetwork_forward(state, packed))
    q_ref = qnetwork_reference(state, params)
    assert q_pallas.shape == (batch, action_size)
    # bf16 weights / matmul operands with f32 accumulation -> loosened tolerance.
    assert jnp.allclose(q_pallas, q_ref, atol=3e-2, rtol=3e-2), "mismatch (batch=8)"

    # Larger batch exercising multi-tile grid + ragged (masked) last block.
    batch2 = 40
    state2 = jax.random.normal(k_state2, (batch2, state_size), jnp.float32)
    q_pallas2 = jax.block_until_ready(qnetwork_forward(state2, packed, tile_b=16))
    q_ref2 = qnetwork_reference(state2, params)
    assert q_pallas2.shape == (batch2, action_size)
    assert jnp.allclose(q_pallas2, q_ref2, atol=3e-2, rtol=3e-2), "mismatch (batch=40)"

    print("KERNEL_OK")
</pallas_src>

<mosaic_0001>
module attributes {stable_mosaic.version = 11 : i64} {
  func.func @qnetwork_kernel(%arg0: i32, %arg1: memref<8x8xf32, #tpu.memory_space<vmem>>, %arg2: memref<8x128xbf16, #tpu.memory_space<vmem>>, %arg3: memref<128x128xbf16, #tpu.memory_space<vmem>>, %arg4: memref<128x8xbf16, #tpu.memory_space<vmem>>, %arg5: memref<1x128xf32, #tpu.memory_space<vmem>>, %arg6: memref<1x128xf32, #tpu.memory_space<vmem>>, %arg7: memref<1x8xf32, #tpu.memory_space<vmem>>, %arg8: memref<8x8xf32, #tpu.memory_space<vmem>>) attributes {dimension_semantics = [#tpu.dimension_semantics<parallel>], iteration_bounds = array<i64: 1>, scalar_prefetch = 0 : i64, scratch_operands = 0 : i64, tpu.core_type = #tpu.core_type<tc>, window_params = [{transform_indices = @transform_0, window_bounds = array<i64: 8, 8>}, {pipeline_mode = #tpu.pipeline_mode<synchronous>, transform_indices = @transform_1, window_bounds = array<i64: 8, 128>}, {pipeline_mode = #tpu.pipeline_mode<synchronous>, transform_indices = @transform_2, window_bounds = array<i64: 128, 128>}, {pipeline_mode = #tpu.pipeline_mode<synchronous>, transform_indices = @transform_3, window_bounds = array<i64: 128, 8>}, {pipeline_mode = #tpu.pipeline_mode<synchronous>, transform_indices = @transform_4, window_bounds = array<i64: 1, 128>}, {pipeline_mode = #tpu.pipeline_mode<synchronous>, transform_indices = @transform_5, window_bounds = array<i64: 1, 128>}, {pipeline_mode = #tpu.pipeline_mode<synchronous>, transform_indices = @transform_6, window_bounds = array<i64: 1, 8>}, {transform_indices = @transform_7, window_bounds = array<i64: 8, 8>}]} {
    %c0 = arith.constant 0 : index
    %c0_0 = arith.constant 0 : index
    %0 = vector.load %arg1[%c0, %c0_0] : memref<8x8xf32, #tpu.memory_space<vmem>>, vector<8x8xf32>
    %1 = arith.truncf %0 : vector<8x8xf32> to vector<8x8xbf16>
    %c0_1 = arith.constant 0 : index
    %c0_2 = arith.constant 0 : index
    %2 = vector.load %arg2[%c0_1, %c0_2] : memref<8x128xbf16, #tpu.memory_space<vmem>>, vector<8x128xbf16>
    %cst = arith.constant dense<0.000000e+00> : vector<8x128xf32>
    %3 = tpu.matmul %1, %2, %cst {dimension_numbers = #tpu.dot_dimension_numbers<[1], [0], [0], [1], [0, 0, 1, 1], [], []>} : vector<8x8xbf16>, vector<8x128xbf16>, vector<8x128xf32> -> vector<8x128xf32>
    %c0_3 = arith.constant 0 : index
    %c0_4 = arith.constant 0 : index
    %4 = vector.load %arg5[%c0_3, %c0_4] : memref<1x128xf32, #tpu.memory_space<vmem>>, vector<1x128xf32>
    %5 = vector.broadcast %4 : vector<1x128xf32> to vector<8x128xf32>
    %6 = arith.addf %3, %5 : vector<8x128xf32>
    %cst_5 = arith.constant 0.000000e+00 : f32
    %7 = vector.broadcast %cst_5 : f32 to vector<8x128xf32>
    %8 = arith.maximumf %6, %7 : vector<8x128xf32>
    %9 = arith.truncf %8 : vector<8x128xf32> to vector<8x128xbf16>
    %c0_6 = arith.constant 0 : index
    %c0_7 = arith.constant 0 : index
    %10 = vector.load %arg3[%c0_6, %c0_7] : memref<128x128xbf16, #tpu.memory_space<vmem>>, vector<128x128xbf16>
    %cst_8 = arith.constant dense<0.000000e+00> : vector<8x128xf32>
    %11 = tpu.matmul %9, %10, %cst_8 {dimension_numbers = #tpu.dot_dimension_numbers<[1], [0], [0], [1], [0, 0, 1, 1], [], []>} : vector<8x128xbf16>, vector<128x128xbf16>, vector<8x128xf32> -> vector<8x128xf32>
    %c0_9 = arith.constant 0 : index
    %c0_10 = arith.constant 0 : index
    %12 = vector.load %arg6[%c0_9, %c0_10] : memref<1x128xf32, #tpu.memory_space<vmem>>, vector<1x128xf32>
    %13 = vector.broadcast %12 : vector<1x128xf32> to vector<8x128xf32>
    %14 = arith.addf %11, %13 : vector<8x128xf32>
    %cst_11 = arith.constant 0.000000e+00 : f32
    %15 = vector.broadcast %cst_11 : f32 to vector<8x128xf32>
    %16 = arith.maximumf %14, %15 : vector<8x128xf32>
    %17 = arith.truncf %16 : vector<8x128xf32> to vector<8x128xbf16>
    %c0_12 = arith.constant 0 : index
    %c0_13 = arith.constant 0 : index
    %18 = vector.load %arg4[%c0_12, %c0_13] : memref<128x8xbf16, #tpu.memory_space<vmem>>, vector<128x8xbf16>
    %cst_14 = arith.constant dense<0.000000e+00> : vector<8x8xf32>
    %19 = tpu.matmul %17, %18, %cst_14 {dimension_numbers = #tpu.dot_dimension_numbers<[1], [0], [0], [1], [0, 0, 1, 1], [], []>} : vector<8x128xbf16>, vector<128x8xbf16>, vector<8x8xf32> -> vector<8x8xf32>
    %c0_15 = arith.constant 0 : index
    %c0_16 = arith.constant 0 : index
    %20 = vector.load %arg7[%c0_15, %c0_16] : memref<1x8xf32, #tpu.memory_space<vmem>>, vector<1x8xf32>
    %21 = vector.broadcast %20 : vector<1x8xf32> to vector<8x8xf32>
    %22 = arith.addf %19, %21 : vector<8x8xf32>
    %c0_17 = arith.constant 0 : index
    %c0_18 = arith.constant 0 : index
    %23 = vector.load %arg8[%c0_17, %c0_18] : memref<8x8xf32, #tpu.memory_space<vmem>>, vector<8x8xf32>
    tpu.vector_store %arg8[%c0_17, %c0_18], %22 {strides = array<i32>} : memref<8x8xf32, #tpu.memory_space<vmem>>, vector<8x8xf32>,
    return
  }
  func.func @transform_0(%arg0: i32) -> (i32, i32) {
    %c0_i32 = arith.constant 0 : i32
    %c0_i32_0 = arith.constant 0 : i32
    return %arg0, %c0_i32 : i32, i32
  }
  func.func @transform_1(%arg0: i32) -> (i32, i32) {
    %c0_i32 = arith.constant 0 : i32
    %c0_i32_0 = arith.constant 0 : i32
    %c0_i32_1 = arith.constant 0 : i32
    return %c0_i32, %c0_i32_0 : i32, i32
  }
  func.func @transform_2(%arg0: i32) -> (i32, i32) {
    %c0_i32 = arith.constant 0 : i32
    %c0_i32_0 = arith.constant 0 : i32
    %c0_i32_1 = arith.constant 0 : i32
    return %c0_i32, %c0_i32_0 : i32, i32
  }
  func.func @transform_3(%arg0: i32) -> (i32, i32) {
    %c0_i32 = arith.constant 0 : i32
    %c0_i32_0 = arith.constant 0 : i32
    %c0_i32_1 = arith.constant 0 : i32
    return %c0_i32, %c0_i32_0 : i32, i32
  }
  func.func @transform_4(%arg0: i32) -> (i32, i32) {
    %c0_i32 = arith.constant 0 : i32
    %c0_i32_0 = arith.constant 0 : i32
    %c0_i32_1 = arith.constant 0 : i32
    return %c0_i32, %c0_i32_0 : i32, i32
  }
  func.func @transform_5(%arg0: i32) -> (i32, i32) {
    %c0_i32 = arith.constant 0 : i32
    %c0_i32_0 = arith.constant 0 : i32
    %c0_i32_1 = arith.constant 0 : i32
    return %c0_i32, %c0_i32_0 : i32, i32
  }
  func.func @transform_6(%arg0: i32) -> (i32, i32) {
    %c0_i32 = arith.constant 0 : i32
    %c0_i32_0 = arith.constant 0 : i32
    %c0_i32_1 = arith.constant 0 : i32
    return %c0_i32, %c0_i32_0 : i32, i32
  }
  func.func @transform_7(%arg0: i32) -> (i32, i32) {
    %c0_i32 = arith.constant 0 : i32
    %c0_i32_0 = arith.constant 0 : i32
    return %arg0, %c0_i32 : i32, i32
  }
}

</mosaic_0001>

<llo_original>
// kernel: tpu_custom_call.1
$region0: #{tpu_custom_call.1}
  #allocation0 [shape = 'u32[]', space=smem, size = 0x4, offset = 0x4, fixed_abs, tag = 'smem constant byte address 0x4 - core index']
  #allocation1 [shape = 'u32[72,128]{1,0:T(1,128)}', space=vmem, size = 0x9000, scoped, tag = 'internal scratch']
  %s0 = inlined_call_operand.hbm [shape: f32[8,8], index: 0, kind: input, shape index: {}]
  %s1 = inlined_call_operand.vmem [shape: bf16[8,128], index: 1, kind: input, shape index: {}]
  %s2 = inlined_call_operand.vmem [shape: bf16[128,128], index: 2, kind: input, shape index: {}]
  %s3 = inlined_call_operand.vmem [shape: bf16[128,8], index: 3, kind: input, shape index: {}]
  %s4 = inlined_call_operand.vmem [shape: f32[1,128], index: 4, kind: input, shape index: {}]
  %s5 = inlined_call_operand.vmem [shape: f32[1,128], index: 5, kind: input, shape index: {}]
  %s6 = inlined_call_operand.vmem [shape: f32[1,8], index: 6, kind: input, shape index: {}]
  %s7 = inlined_call_operand.hbm [shape: f32[8,8], index: 7, kind: output, shape index: {}]
  %s8 = sld [smem:[#allocation0]]
  $region42: #{tpu_custom_call.1} parent=0
    _
  %s10 = ssub.s32 1, %s8
  %s11 = scalar_select 0, %s10, %s8
  $region1: #{tpu_custom_call.1} parent=0
    #allocation2 [shape = 'u8[4096]{0}', space=vmem, size = 0x1000, scoped, tag = 'input window, operand 0, single buffered']
    #allocation3 [shape = 's32[1]{0}', space=sflag, size = 0x4, scoped, tag = 'scoped memory for tpu_custom_call.1']
    #allocation4 [shape = 's32[1]{0}', space=sflag, size = 0x4, scoped, tag = 'scoped memory for tpu_custom_call.1']
    #allocation5 [shape = 'u8[4096]{0}', space=vmem, size = 0x1000, scoped, tag = 'output window, operand 0, single buffered']
    %12 = vsyncpa [#allocation3], 0
    %13 = vsyncpa [#allocation4], 0
    // Predicated region
    $region2: #{tpu_custom_call.1} parent=1 // pred_check
      _
    $region3: #{tpu_custom_call.1} parent=1 // pred_check_branch
      %15 = sbr.rel (0) target = $region5
    $region4: #{tpu_custom_call.1} parent=1 // pred_region
      %17 = vsyncadd [#allocation3], 0
      %s19 = sshll.u32 %s0, 4
      %s20 = int_to_ptr.hbm [resolvable:$true] %s19
      %s21 = sshll.u32 [#allocation2], 4
      %s22 = int_to_ptr.vmem [resolvable:$true] %s21
      %24 = dma.hbm_to_vmem [thread:$0]  %s20, 128, %s22, [#allocation3]
    $region5: #{tpu_custom_call.1} parent=1 // pred_fallthru
      _
    // Predicated region
    $region6: #{tpu_custom_call.1} parent=1 // pred_check
      _
    $region7: #{tpu_custom_call.1} parent=1 // pred_check_branch
      %26 = sbr.rel (0) target = $region9
    $region8: #{tpu_custom_call.1} parent=1 // pred_region
      _
    $region9: #{tpu_custom_call.1} parent=1 // pred_fallthru
      _
    // Predicated region
    $region10: #{tpu_custom_call.1} parent=1 // pred_check
      _
    $region11: #{tpu_custom_call.1} parent=1 // pred_check_branch
      %28 = sbr.rel (0) target = $region13
    $region12: #{tpu_custom_call.1} parent=1 // pred_region
      _
    $region13: #{tpu_custom_call.1} parent=1 // pred_fallthru
      _
    // Predicated region
    $region14: #{tpu_custom_call.1} parent=1 // pred_check
      _
    $region15: #{tpu_custom_call.1} parent=1 // pred_check_branch
      %30 = sbr.rel (0) target = $region17
    $region16: #{tpu_custom_call.1} parent=1 // pred_region
      _
    $region17: #{tpu_custom_call.1} parent=1 // pred_fallthru
      _
    // Predicated region
    $region18: #{tpu_custom_call.1} parent=1 // pred_check
      _
    $region19: #{tpu_custom_call.1} parent=1 // pred_check_branch
      %32 = sbr.rel (0) target = $region21
    $region20: #{tpu_custom_call.1} parent=1 // pred_region
      _
    $region21: #{tpu_custom_call.1} parent=1 // pred_fallthru
      _
    // Predicated region
    $region22: #{tpu_custom_call.1} parent=1 // pred_check
      _
    $region23: #{tpu_custom_call.1} parent=1 // pred_check_branch
      %34 = sbr.rel (0) target = $region25
    $region24: #{tpu_custom_call.1} parent=1 // pred_region
      _
    $region25: #{tpu_custom_call.1} parent=1 // pred_fallthru
      _
    // Predicated region
    $region26: #{tpu_custom_call.1} parent=1 // pred_check
      _
    $region27: #{tpu_custom_call.1} parent=1 // pred_check_branch
      %36 = sbr.rel (0) target = $region29
    $region28: #{tpu_custom_call.1} parent=1 // pred_region
      _
    $region29: #{tpu_custom_call.1} parent=1 // pred_fallthru
      _
    // Predicated region
    $region30: #{tpu_custom_call.1} parent=1 // pred_check
      _
    $region31: #{tpu_custom_call.1} parent=1 // pred_check_branch
      %38 = sbr.rel (0) target = $region33
    $region32: #{tpu_custom_call.1} parent=1 // pred_region
      %40 = dma.done [#allocation3], 128
    $region33: #{tpu_custom_call.1} parent=1 // pred_fallthru
      _
    %v42 = vld [vmem:[#allocation2] sm:$0xff]
    %v43 = vpack.c.bf16 %v42, %v42
    %v44 = vld [vmem:[%s1] sm:$0xf]
    %v45 = vld [vmem:[%s4] sm:$0x1]
    %v47 = vperm.slane %v45, 0
    %vm49 = vcmask 64512
    %v51 = vsel %vm49, %v43, 0
    %vm53 = vcmask 1043456
    %v55 = vsel %vm53, %v44, 0
    %57 = vmatpush.bf16.msra.mxu0 0
    %58 = vmatpush.bf16.msra.mxu0 0
    %59 = vmatpush.bf16.msra.mxu0 0
    %60 = vmatpush.bf16.msra.mxu0 0
    %61 = vmatpush.bf16.msra.mxu0 0
    %62 = vmatpush.bf16.msra.mxu0 0
    %63 = vmatpush.bf16.msra.mxu0 0
    %64 = vmatpush.bf16.msra.mxu0 %v55
    %65 = vmatmul.bf16.gmra.mxu0 %v51
    %v66 = vpop.f32.mrf.mxu0
    %v67 = vadd.f32 %v47, %v66
    %v68 = vpop.f32.mrf.mxu0
    %69 = vdwg.mxu0
    %v70 = vmax.f32 %v67, 0.0
    %v71 = vpack.c.bf16 %v70, %v70
    %v72 = vld [vmem:[%s2] sm:$0xf]
    %v73 = vld [vmem:[%s2 + $0x4] sm:$0xf]
    %v74 = vld [vmem:[%s2 + $0x8] sm:$0xf]
    %v75 = vld [vmem:[%s2 + $0xc] sm:$0xf]
    %v76 = vld [vmem:[%s2 + $0x10] sm:$0xf]
    %v77 = vld [vmem:[%s2 + $0x14] sm:$0xf]
    %v78 = vld [vmem:[%s2 + $0x18] sm:$0xf]
    %v79 = vld [vmem:[%s2 + $0x1c] sm:$0xf]
    %v80 = vld [vmem:[%s2 + $0x20] sm:$0xf]
    %v81 = vld [vmem:[%s2 + $0x24] sm:$0xf]
    %v82 = vld [vmem:[%s2 + $0x28] sm:$0xf]
    %v83 = vld [vmem:[%s2 + $0x2c] sm:$0xf]
    %v84 = vld [vmem:[%s2 + $0x30] sm:$0xf]
    %v85 = vld [vmem:[%s2 + $0x34] sm:$0xf]
    %v86 = vld [vmem:[%s2 + $0x38] sm:$0xf]
    %v87 = vld [vmem:[%s2 + $0x3c] sm:$0xf]
    %v88 = vld [vmem:[%s5] sm:$0x1]
    %v90 = vperm.slane %v88, 0
    %v108 = vunpack.c.l.b16 %v72
    %v109 = vunpack.c.l.b16 %v73
    %v110 = vunpack.c.l.b16 %v74
    %v111 = vunpack.c.l.b16 %v75
    %v112 = vunpack.c.l.b16 %v76
    %v113 = vunpack.c.l.b16 %v77
    %v114 = vunpack.c.l.b16 %v78
    %v115 = vunpack.c.l.b16 %v79
    %v116 = vunpack.c.l.b16 %v80
    %v117 = vunpack.c.l.b16 %v81
    %v118 = vunpack.c.l.b16 %v82
    %v119 = vunpack.c.l.b16 %v83
    %v120 = vunpack.c.l.b16 %v84
    %v121 = vunpack.c.l.b16 %v85
    %v122 = vunpack.c.l.b16 %v86
    %v123 = vunpack.c.l.b16 %v87
    %v124 = vpack.c.b16 %v109, %v108
    %v125 = vpack.c.b16 %v111, %v110
    %v126 = vpack.c.b16 %v113, %v112
    %v127 = vpack.c.b16 %v115, %v114
    %v128 = vpack.c.b16 %v117, %v116
    %v129 = vpack.c.b16 %v119, %v118
    %v130 = vpack.c.b16 %v121, %v120
    %v131 = vpack.c.b16 %v123, %v122
    %140 = vmatpush.bf16.msra.mxu0 %v131
    %141 = vmatpush.bf16.msra.mxu0 %v130
    %142 = vmatpush.bf16.msra.mxu0 %v129
    %143 = vmatpush.bf16.msra.mxu0 %v128
    %144 = vmatpush.bf16.msra.mxu0 %v127
    %145 = vmatpush.bf16.msra.mxu0 %v126
    %146 = vmatpush.bf16.msra.mxu0 %v125
    %147 = vmatpush.bf16.msra.mxu0 %v124
    %148 = vmatmul.bf16.gmra.mxu0 %v71
    %v149 = vpop.f32.mrf.mxu0
    %v150 = vadd.f32 %v90, %v149
    %v151 = vpop.f32.mrf.mxu0
    %152 = vdwg.mxu0
    %v153 = vmax.f32 %v150, 0.0
    %v154 = vpack.c.bf16 %v153, %v153
    %v155 = vld [vmem:[%s3] sm:$0xf]
    %v156 = vld [vmem:[%s3 + $0x4] sm:$0xf]
    %v157 = vld [vmem:[%s3 + $0x8] sm:$0xf]
    %v158 = vld [vmem:[%s3 + $0xc] sm:$0xf]
    %v159 = vld [vmem:[%s3 + $0x10] sm:$0xf]
    %v160 = vld [vmem:[%s3 + $0x14] sm:$0xf]
    %v161 = vld [vmem:[%s3 + $0x18] sm:$0xf]
    %v162 = vld [vmem:[%s3 + $0x1c] sm:$0xf]
    %v163 = vld [vmem:[%s3 + $0x20] sm:$0xf]
    %v164 = vld [vmem:[%s3 + $0x24] sm:$0xf]
    %v165 = vld [vmem:[%s3 + $0x28] sm:$0xf]
    %v166 = vld [vmem:[%s3 + $0x2c] sm:$0xf]
    %v167 = vld [vmem:[%s3 + $0x30] sm:$0xf]
    %v168 = vld [vmem:[%s3 + $0x34] sm:$0xf]
    %v169 = vld [vmem:[%s3 + $0x38] sm:$0xf]
    %v170 = vld [vmem:[%s3 + $0x3c] sm:$0xf]
    %v171 = vld [vmem:[%s6] sm:$0x1]
    %v173 = vperm.slane %v171, 0
    %v191 = vunpack.c.l.b16 %v155
    %v192 = vunpack.c.l.b16 %v156
    %v193 = vunpack.c.l.b16 %v157
    %v194 = vunpack.c.l.b16 %v158
    %v195 = vunpack.c.l.b16 %v159
    %v196 = vunpack.c.l.b16 %v160
    %v197 = vunpack.c.l.b16 %v161
    %v198 = vunpack.c.l.b16 %v162
    %v199 = vunpack.c.l.b16 %v163
    %v200 = vunpack.c.l.b16 %v164
    %v201 = vunpack.c.l.b16 %v165
    %v202 = vunpack.c.l.b16 %v166
    %v203 = vunpack.c.l.b16 %v167
    %v204 = vunpack.c.l.b16 %v168
    %v205 = vunpack.c.l.b16 %v169
    %v206 = vunpack.c.l.b16 %v170
    %v207 = vpack.c.b16 %v192, %v191
    %v208 = vpack.c.b16 %v194, %v193
    %v209 = vpack.c.b16 %v196, %v195
    %v210 = vpack.c.b16 %v198, %v197
    %v211 = vpack.c.b16 %v200, %v199
    %v212 = vpack.c.b16 %v202, %v201
    %v213 = vpack.c.b16 %v204, %v203
    %v214 = vpack.c.b16 %v206, %v205
    %223 = vmatpush.bf16.msra.mxu0 %v214
    %224 = vmatpush.bf16.msra.mxu0 %v213
    %225 = vmatpush.bf16.msra.mxu0 %v212
    %226 = vmatpush.bf16.msra.mxu0 %v211
    %227 = vmatpush.bf16.msra.mxu0 %v210
    %228 = vmatpush.bf16.msra.mxu0 %v209
    %229 = vmatpush.bf16.msra.mxu0 %v208
    %230 = vmatpush.bf16.msra.mxu0 %v207
    %231 = vmatmul.bf16.gmra.mxu0 %v154
    %v232 = vpop.f32.mrf.mxu0
    %v233 = vadd.f32 %v173, %v232
    %v234 = vpop.f32.mrf.mxu0
    %235 = vdwg.mxu0
    %236 = vst.msk [vmem:[#allocation5] sm:$0xff] %vm49, %v233
    // Predicated region
    $region34: #{tpu_custom_call.1} parent=1 // pred_check
      _
    $region35: #{tpu_custom_call.1} parent=1 // pred_check_branch
      %238 = sbr.rel (0) target = $region37
    $region36: #{tpu_custom_call.1} parent=1 // pred_region
      %240 = vsyncadd [#allocation4], 0
      %s242 = sshll.u32 [#allocation5], 4
      %s243 = int_to_ptr.vmem [resolvable:$true] %s242
      %s244 = sshll.u32 %s7, 4
      %s245 = int_to_ptr.hbm [resolvable:$true] %s244
      %247 = dma.vmem_to_hbm [thread:$0]  %s243, 128, %s245, [#allocation4]
    $region37: #{tpu_custom_call.1} parent=1 // pred_fallthru
      _
    // Predicated region
    $region38: #{tpu_custom_call.1} parent=1 // pred_check
      _
    $region39: #{tpu_custom_call.1} parent=1 // pred_check_branch
      %249 = sbr.rel (0) target = $region41
    $region40: #{tpu_custom_call.1} parent=1 // pred_region
      %251 = dma.done [#allocation4], 128
    $region41: #{tpu_custom_call.1} parent=1 // pred_fallthru
      _
    %252 = vsyncpa [#allocation3], 1
    %253 = vsyncpa [#allocation4], 1

</llo_original>
